<compile_context>
chip_gen: v7x
topology: tpu7x:2x2x1
jax: 0.10.0
libtpu: 0.0.40
codegen_flags: <defaults>
</compile_context>

<pallas_src>
import jax
import jax.numpy as jnp
from jax.experimental import pallas as pl
from jax.experimental.pallas import tpu as pltpu


def _round_up(x, m):
    return ((x + m - 1) // m) * m


def _head_kernel(x_ref, wd_ref, bd_ref, wo_ref, bo_ref, out_ref):
    # x_ref:  [tb, H]      f32  (CLS activations; cast to bf16 here, VPU pass)
    # wd_ref: [H, H]       bf16 (resident)
    # bd_ref: [1, H]       f32  (resident)
    # wo_ref: [H, n_pad]   bf16 (zero-padded to 128 lanes, resident)
    # bo_ref: [1, n_pad]   f32  (zero-padded, resident)
    # out_ref:[tb, n_pad]  f32
    x = x_ref[...].astype(jnp.bfloat16)                                 # in-kernel cast
    h = jnp.dot(x, wd_ref[...], preferred_element_type=jnp.float32)    # MXU, f32 acc
    h = jnp.tanh(h + bd_ref[...])                                      # f32 bias + EUP tanh (v5e-safe)
    y = jnp.dot(h.astype(jnp.bfloat16), wo_ref[...],
                preferred_element_type=jnp.float32)                    # MXU, f32 acc
    out_ref[...] = (y + bo_ref[...]).astype(out_ref.dtype)


def roberta_classification_head(features, w_dense, b_dense, w_out, b_out,
                                *, block_b=512):
    """features: [B, T, H] float32; weights stored [in, out]; returns [B, num_labels]."""
    B, T, H = features.shape
    num_labels = w_out.shape[1]

    LANES, SUBLANES = 128, 8
    n_pad = _round_up(num_labels, LANES)              # lane-dense output width

    # --- batch tiling: balanced tiles; >= 2 grid steps when enough work so the
    #     "parallel" batch axis actually shards across both v7x TensorCores.
    n_tiles = pl.cdiv(B, block_b)
    if n_tiles < 2 and B >= 2 * SUBLANES:
        n_tiles = 2
    tb = _round_up(pl.cdiv(B, n_tiles), SUBLANES)
    grid = (pl.cdiv(B, tb),)                          # boundary block handled by Pallas

    # --- fuse the CLS slice into the activation DMA when the lane constraint
    #     allows it (H % 128 == 0 or T == 1): view features as [B, T*H];
    #     block (tb, H) at column-block 0 is exactly features[:, 0, :].
    if T == 1 or H % LANES == 0:
        x_in = features.reshape(B, T * H)             # metadata-only reshape
    else:
        x_in = features[:, 0, :]                      # fallback: single wrapper slice
    x_spec = pl.BlockSpec((tb, H), lambda i: (i, 0))

    # --- bf16 MXU operands (one-time weight cast); pad out_proj to 128 lanes.
    wd_bf = w_dense.astype(jnp.bfloat16)
    wo_bf = jnp.pad(w_out, ((0, 0), (0, n_pad - num_labels))).astype(jnp.bfloat16)
    bd_f32 = jnp.asarray(b_dense, jnp.float32).reshape(1, H)
    bo_f32 = jnp.pad(jnp.asarray(b_out, jnp.float32).reshape(1, num_labels),
                     ((0, 0), (0, n_pad - num_labels)))

    # Revisited blocks (constant index_map): one VMEM buffer is enough.
    resident = dict(pipeline_mode=pl.Buffered(1))

    # --- VMEM budget: only raise the scoped limit if the tiles need it.
    vmem_est = (2 * tb * H * 4            # activation tile, f32 in, double-buffered
                + 2 * tb * n_pad * 4      # output tile, f32, double-buffered
                + H * H * 2 + H * 4       # resident dense weight (bf16) + bias (f32)
                + H * n_pad * 2 + n_pad * 4)
    cp = dict(dimension_semantics=("parallel",))      # megacore sharding on v7x
    if vmem_est > (16 << 20):                         # conservative v5e default floor
        cp["vmem_limit_bytes"] = min(int(1.5 * vmem_est), 64 << 20)  # v7x physical cap

    out = pl.pallas_call(
        _head_kernel,
        out_shape=jax.ShapeDtypeStruct((B, n_pad), jnp.float32),
        grid=grid,
        in_specs=[
            x_spec,                                                   # CLS rows, batch-tiled
            pl.BlockSpec((H, H), lambda i: (0, 0), **resident),      # dense W, resident
            pl.BlockSpec((1, H), lambda i: (0, 0), **resident),      # dense b
            pl.BlockSpec((H, n_pad), lambda i: (0, 0), **resident),  # out_proj W
            pl.BlockSpec((1, n_pad), lambda i: (0, 0), **resident),  # out_proj b
        ],
        out_specs=pl.BlockSpec((tb, n_pad), lambda i: (i, 0)),
        compiler_params=pltpu.CompilerParams(**cp),
    )(x_in, wd_bf, bd_f32, wo_bf, bo_f32)

    return out[:, :num_labels]


def reference_f32(features, w_dense, b_dense, w_out, b_out):
    x = features[:, 0, :]
    h = jnp.tanh(x @ w_dense + jnp.asarray(b_dense).reshape(1, -1))
    return h @ w_out + jnp.asarray(b_out).reshape(1, -1)


def reference_bf16(features, w_dense, b_dense, w_out, b_out):
    # Mirrors the kernel recipe: bf16 MXU operands, f32 accumulation, f32 tanh.
    x = features[:, 0, :].astype(jnp.bfloat16)
    h = jnp.dot(x, w_dense.astype(jnp.bfloat16), preferred_element_type=jnp.float32)
    h = jnp.tanh(h + jnp.asarray(b_dense, jnp.float32).reshape(1, -1))
    y = jnp.dot(h.astype(jnp.bfloat16), w_out.astype(jnp.bfloat16),
                preferred_element_type=jnp.float32)
    return y + jnp.asarray(b_out, jnp.float32).reshape(1, -1)


if __name__ == "__main__":
    # H is lane-aligned (128) so the fused CLS-slice DMA path is exercised;
    # B=2 (< tile of 8) exercises the partial-boundary-block path.
    B, T, H, NUM_LABELS = 2, 8, 128, 2

    key = jax.random.PRNGKey(0)
    k_feat, k_wd, k_bd, k_wo, k_bo = jax.random.split(key, 5)

    features = jax.random.normal(k_feat, (B, T, H), dtype=jnp.float32)
    # deterministic synthetic parameters (config.hidden_size=H, 2 labels), [in, out] layout
    w_dense = jax.random.normal(k_wd, (H, H), dtype=jnp.float32) * 0.05
    b_dense = jax.random.normal(k_bd, (1, H), dtype=jnp.float32) * 0.05
    w_out = jax.random.normal(k_wo, (H, NUM_LABELS), dtype=jnp.float32) * 0.05
    b_out = jax.random.normal(k_bo, (1, NUM_LABELS), dtype=jnp.float32) * 0.05

    logits = roberta_classification_head(features, w_dense, b_dense, w_out, b_out)
    logits = jax.block_until_ready(logits)

    assert logits.shape == (B, NUM_LABELS), logits.shape

    # Exact-recipe reference (bf16 operands, f32 accumulation, f32 tanh).
    ref_b = reference_bf16(features, w_dense, b_dense, w_out, b_out)
    assert jnp.allclose(logits, ref_b, atol=1e-3, rtol=1e-3), \
        "mismatch vs bf16-recipe reference"

    # Semantics sanity check vs full-f32 PyTorch-equivalent reference
    # (looser tolerance: matmul operands are bf16 in the kernel).
    ref_f = reference_f32(features, w_dense, b_dense, w_out, b_out)
    assert jnp.allclose(logits, ref_f, atol=2e-2, rtol=2e-2), \
        "mismatch vs f32 reference"

    print("KERNEL_OK")
</pallas_src>

<mosaic_0001>
module attributes {stable_mosaic.version = 11 : i64} {
  func.func @_head_kernel(%arg0: i32, %arg1: memref<8x128xf32, #tpu.memory_space<vmem>>, %arg2: memref<128x128xbf16, #tpu.memory_space<vmem>>, %arg3: memref<1x128xf32, #tpu.memory_space<vmem>>, %arg4: memref<128x128xbf16, #tpu.memory_space<vmem>>, %arg5: memref<1x128xf32, #tpu.memory_space<vmem>>, %arg6: memref<8x128xf32, #tpu.memory_space<vmem>>) attributes {dimension_semantics = [#tpu.dimension_semantics<parallel>], iteration_bounds = array<i64: 1>, scalar_prefetch = 0 : i64, scratch_operands = 0 : i64, tpu.core_type = #tpu.core_type<tc>, window_params = [{transform_indices = @transform_0, window_bounds = array<i64: 8, 128>}, {pipeline_mode = #tpu.pipeline_mode<synchronous>, transform_indices = @transform_1, window_bounds = array<i64: 128, 128>}, {pipeline_mode = #tpu.pipeline_mode<synchronous>, transform_indices = @transform_2, window_bounds = array<i64: 1, 128>}, {pipeline_mode = #tpu.pipeline_mode<synchronous>, transform_indices = @transform_3, window_bounds = array<i64: 128, 128>}, {pipeline_mode = #tpu.pipeline_mode<synchronous>, transform_indices = @transform_4, window_bounds = array<i64: 1, 128>}, {transform_indices = @transform_5, window_bounds = array<i64: 8, 128>}]} {
    %c0 = arith.constant 0 : index
    %c0_0 = arith.constant 0 : index
    %0 = vector.load %arg1[%c0, %c0_0] : memref<8x128xf32, #tpu.memory_space<vmem>>, vector<8x128xf32>
    %1 = arith.truncf %0 : vector<8x128xf32> to vector<8x128xbf16>
    %c0_1 = arith.constant 0 : index
    %c0_2 = arith.constant 0 : index
    %2 = vector.load %arg2[%c0_1, %c0_2] : memref<128x128xbf16, #tpu.memory_space<vmem>>, vector<128x128xbf16>
    %cst = arith.constant dense<0.000000e+00> : vector<8x128xf32>
    %3 = tpu.matmul %1, %2, %cst {dimension_numbers = #tpu.dot_dimension_numbers<[1], [0], [0], [1], [0, 0, 1, 1], [], []>} : vector<8x128xbf16>, vector<128x128xbf16>, vector<8x128xf32> -> vector<8x128xf32>
    %c0_3 = arith.constant 0 : index
    %c0_4 = arith.constant 0 : index
    %4 = vector.load %arg3[%c0_3, %c0_4] : memref<1x128xf32, #tpu.memory_space<vmem>>, vector<1x128xf32>
    %5 = vector.broadcast %4 : vector<1x128xf32> to vector<8x128xf32>
    %6 = arith.addf %3, %5 : vector<8x128xf32>
    %7 = math.tanh %6 : vector<8x128xf32>
    %8 = arith.truncf %7 : vector<8x128xf32> to vector<8x128xbf16>
    %c0_5 = arith.constant 0 : index
    %c0_6 = arith.constant 0 : index
    %9 = vector.load %arg4[%c0_5, %c0_6] : memref<128x128xbf16, #tpu.memory_space<vmem>>, vector<128x128xbf16>
    %cst_7 = arith.constant dense<0.000000e+00> : vector<8x128xf32>
    %10 = tpu.matmul %8, %9, %cst_7 {dimension_numbers = #tpu.dot_dimension_numbers<[1], [0], [0], [1], [0, 0, 1, 1], [], []>} : vector<8x128xbf16>, vector<128x128xbf16>, vector<8x128xf32> -> vector<8x128xf32>
    %c0_8 = arith.constant 0 : index
    %c0_9 = arith.constant 0 : index
    %11 = vector.load %arg5[%c0_8, %c0_9] : memref<1x128xf32, #tpu.memory_space<vmem>>, vector<1x128xf32>
    %12 = vector.broadcast %11 : vector<1x128xf32> to vector<8x128xf32>
    %13 = arith.addf %10, %12 : vector<8x128xf32>
    %c0_10 = arith.constant 0 : index
    %c0_11 = arith.constant 0 : index
    %14 = vector.load %arg6[%c0_10, %c0_11] : memref<8x128xf32, #tpu.memory_space<vmem>>, vector<8x128xf32>
    tpu.vector_store %arg6[%c0_10, %c0_11], %13 {strides = array<i32>} : memref<8x128xf32, #tpu.memory_space<vmem>>, vector<8x128xf32>,
    return
  }
  func.func @transform_0(%arg0: i32) -> (i32, i32) {
    %c0_i32 = arith.constant 0 : i32
    %c0_i32_0 = arith.constant 0 : i32
    return %arg0, %c0_i32 : i32, i32
  }
  func.func @transform_1(%arg0: i32) -> (i32, i32) {
    %c0_i32 = arith.constant 0 : i32
    %c0_i32_0 = arith.constant 0 : i32
    %c0_i32_1 = arith.constant 0 : i32
    return %c0_i32, %c0_i32_0 : i32, i32
  }
  func.func @transform_2(%arg0: i32) -> (i32, i32) {
    %c0_i32 = arith.constant 0 : i32
    %c0_i32_0 = arith.constant 0 : i32
    %c0_i32_1 = arith.constant 0 : i32
    return %c0_i32, %c0_i32_0 : i32, i32
  }
  func.func @transform_3(%arg0: i32) -> (i32, i32) {
    %c0_i32 = arith.constant 0 : i32
    %c0_i32_0 = arith.constant 0 : i32
    %c0_i32_1 = arith.constant 0 : i32
    return %c0_i32, %c0_i32_0 : i32, i32
  }
  func.func @transform_4(%arg0: i32) -> (i32, i32) {
    %c0_i32 = arith.constant 0 : i32
    %c0_i32_0 = arith.constant 0 : i32
    %c0_i32_1 = arith.constant 0 : i32
    return %c0_i32, %c0_i32_0 : i32, i32
  }
  func.func @transform_5(%arg0: i32) -> (i32, i32) {
    %c0_i32 = arith.constant 0 : i32
    %c0_i32_0 = arith.constant 0 : i32
    return %arg0, %c0_i32 : i32, i32
  }
}

</mosaic_0001>

<llo_original>
// kernel: tpu_custom_call.1
$region0: #{tpu_custom_call.1}
  #allocation0 [shape = 'u32[]', space=smem, size = 0x4, offset = 0x4, fixed_abs, tag = 'smem constant byte address 0x4 - core index']
  #allocation1 [shape = 'u32[144,128]{1,0:T(1,128)}', space=vmem, size = 0x12000, scoped, tag = 'internal scratch']
  %s0 = inlined_call_operand.hbm [shape: f32[2,1024], index: 0, kind: input, shape index: {}]
  %s1 = inlined_call_operand.hbm [shape: bf16[128,128], index: 1, kind: input, shape index: {}]
  %s2 = inlined_call_operand.vmem [shape: f32[1,128], index: 2, kind: input, shape index: {}]
  %s3 = inlined_call_operand.hbm [shape: bf16[128,128], index: 3, kind: input, shape index: {}]
  %s4 = inlined_call_operand.vmem [shape: f32[1,128], index: 4, kind: input, shape index: {}]
  %s5 = inlined_call_operand.hbm [shape: f32[2,128], index: 5, kind: output, shape index: {}]
  %s6 = sld [smem:[#allocation0]]
  $region42: #{tpu_custom_call.1} parent=0
    _
  %s8 = ssub.s32 1, %s6
  %s9 = scalar_select 0, %s8, %s6
  $region1: #{tpu_custom_call.1} parent=0
    #allocation2 [shape = 'u8[4096]{0}', space=vmem, size = 0x1000, scoped, tag = 'input window, operand 0, single buffered']
    #allocation3 [shape = 's32[1]{0}', space=sflag, size = 0x4, scoped, tag = 'scoped memory for tpu_custom_call.1']
    #allocation4 [shape = 's32[1]{0}', space=sflag, size = 0x4, scoped, tag = 'scoped memory for tpu_custom_call.1']
    #allocation5 [shape = 'u8[32768]{0}', space=vmem, size = 0x8000, scoped, tag = 'input window, operand 1, single buffered']
    #allocation6 [shape = 's32[1]{0}', space=sflag, size = 0x4, scoped, tag = 'scoped memory for tpu_custom_call.1']
    #allocation7 [shape = 'u8[32768]{0}', space=vmem, size = 0x8000, scoped, tag = 'input window, operand 3, single buffered']
    #allocation8 [shape = 'u8[4096]{0}', space=vmem, size = 0x1000, scoped, tag = 'output window, operand 0, single buffered']
    %10 = vsyncpa [#allocation3], 0
    %11 = vsyncpa [#allocation6], 0
    %12 = vsyncpa [#allocation4], 0
    // Predicated region
    $region2: #{tpu_custom_call.1} parent=1 // pred_check
      _
    $region3: #{tpu_custom_call.1} parent=1 // pred_check_branch
      %14 = sbr.rel (0) target = $region5
    $region4: #{tpu_custom_call.1} parent=1 // pred_region
      %s16 = ssub.s32 128, 32
      %17 = vsyncadd [#allocation3], %s16
      %s18 = sshll.u32 [#allocation2], 4
      %s19 = int_to_ptr.vmem [resolvable:$true] %s18
      %24 = dma.hbm_to_vmem [thread:$0]  %s0, 32, %s19, [#allocation3], 256, 32, 2
    $region5: #{tpu_custom_call.1} parent=1 // pred_fallthru
      _
    // Predicated region
    $region6: #{tpu_custom_call.1} parent=1 // pred_check
      _
    $region7: #{tpu_custom_call.1} parent=1 // pred_check_branch
      %26 = sbr.rel (0) target = $region9
    $region8: #{tpu_custom_call.1} parent=1 // pred_region
      %s28 = ssub.s32 1024, 1024
      %29 = vsyncadd [#allocation6], %s28
      %s30 = sshll.u32 [#allocation5], 4
      %s31 = int_to_ptr.vmem [resolvable:$true] %s30
      %36 = dma.hbm_to_vmem [thread:$0]  %s1, 1024, %s31, [#allocation6], 64, 64, 4
    $region9: #{tpu_custom_call.1} parent=1 // pred_fallthru
      _
    // Predicated region
    $region10: #{tpu_custom_call.1} parent=1 // pred_check
      _
    $region11: #{tpu_custom_call.1} parent=1 // pred_check_branch
      %38 = sbr.rel (0) target = $region13
    $region12: #{tpu_custom_call.1} parent=1 // pred_region
      _
    $region13: #{tpu_custom_call.1} parent=1 // pred_fallthru
      _
    // Predicated region
    $region14: #{tpu_custom_call.1} parent=1 // pred_check
      _
    $region15: #{tpu_custom_call.1} parent=1 // pred_check_branch
      %40 = sbr.rel (0) target = $region17
    $region16: #{tpu_custom_call.1} parent=1 // pred_region
      %s42 = ssub.s32 1024, 1024
      %43 = vsyncadd [#allocation6], %s42
      %s44 = sshll.u32 [#allocation7], 4
      %s45 = int_to_ptr.vmem [resolvable:$true] %s44
      %50 = dma.hbm_to_vmem [thread:$0]  %s3, 1024, %s45, [#allocation6], 64, 64, 4
    $region17: #{tpu_custom_call.1} parent=1 // pred_fallthru
      _
    // Predicated region
    $region18: #{tpu_custom_call.1} parent=1 // pred_check
      _
    $region19: #{tpu_custom_call.1} parent=1 // pred_check_branch
      %52 = sbr.rel (0) target = $region21
    $region20: #{tpu_custom_call.1} parent=1 // pred_region
      _
    $region21: #{tpu_custom_call.1} parent=1 // pred_fallthru
      _
    // Predicated region
    $region22: #{tpu_custom_call.1} parent=1 // pred_check
      _
    $region23: #{tpu_custom_call.1} parent=1 // pred_check_branch
      %54 = sbr.rel (0) target = $region25
    $region24: #{tpu_custom_call.1} parent=1 // pred_region
      %55 = dma.done [#allocation3], 128
    $region25: #{tpu_custom_call.1} parent=1 // pred_fallthru
      _
    // Predicated region
    $region26: #{tpu_custom_call.1} parent=1 // pred_check
      _
    $region27: #{tpu_custom_call.1} parent=1 // pred_check_branch
      %57 = sbr.rel (0) target = $region29
    $region28: #{tpu_custom_call.1} parent=1 // pred_region
      %58 = dma.done [#allocation6], 1024
    $region29: #{tpu_custom_call.1} parent=1 // pred_fallthru
      _
    // Predicated region
    $region30: #{tpu_custom_call.1} parent=1 // pred_check
      _
    $region31: #{tpu_custom_call.1} parent=1 // pred_check_branch
      %60 = sbr.rel (0) target = $region33
    $region32: #{tpu_custom_call.1} parent=1 // pred_region
      %61 = dma.done [#allocation6], 1024
    $region33: #{tpu_custom_call.1} parent=1 // pred_fallthru
      _
    %v63 = vld [vmem:[#allocation2] sm:$0xff]
    %v64 = vpack.c.bf16 %v63, %v63
    %v65 = vld [vmem:[#allocation5] sm:$0xf]
    %v66 = vld [vmem:[#allocation5 + $0x4] sm:$0xf]
    %v67 = vld [vmem:[#allocation5 + $0x8] sm:$0xf]
    %v68 = vld [vmem:[#allocation5 + $0xc] sm:$0xf]
    %v69 = vld [vmem:[#allocation5 + $0x10] sm:$0xf]
    %v70 = vld [vmem:[#allocation5 + $0x14] sm:$0xf]
    %v71 = vld [vmem:[#allocation5 + $0x18] sm:$0xf]
    %v72 = vld [vmem:[#allocation5 + $0x1c] sm:$0xf]
    %v73 = vld [vmem:[#allocation5 + $0x20] sm:$0xf]
    %v74 = vld [vmem:[#allocation5 + $0x24] sm:$0xf]
    %v75 = vld [vmem:[#allocation5 + $0x28] sm:$0xf]
    %v76 = vld [vmem:[#allocation5 + $0x2c] sm:$0xf]
    %v77 = vld [vmem:[#allocation5 + $0x30] sm:$0xf]
    %v78 = vld [vmem:[#allocation5 + $0x34] sm:$0xf]
    %v79 = vld [vmem:[#allocation5 + $0x38] sm:$0xf]
    %v80 = vld [vmem:[#allocation5 + $0x3c] sm:$0xf]
    %v81 = vld [vmem:[%s2] sm:$0x1]
    %v83 = vlaneseq
    %v84 = vshrl.u32 %v83, 7
    %v85 = vsub.s32 0, %v84
    %v86 = vrot.slane %v81, %v85
    %v104 = vunpack.c.l.b16 %v65
    %v105 = vunpack.c.l.b16 %v66
    %v106 = vunpack.c.l.b16 %v67
    %v107 = vunpack.c.l.b16 %v68
    %v108 = vunpack.c.l.b16 %v69
    %v109 = vunpack.c.l.b16 %v70
    %v110 = vunpack.c.l.b16 %v71
    %v111 = vunpack.c.l.b16 %v72
    %v112 = vunpack.c.l.b16 %v73
    %v113 = vunpack.c.l.b16 %v74
    %v114 = vunpack.c.l.b16 %v75
    %v115 = vunpack.c.l.b16 %v76
    %v116 = vunpack.c.l.b16 %v77
    %v117 = vunpack.c.l.b16 %v78
    %v118 = vunpack.c.l.b16 %v79
    %v119 = vunpack.c.l.b16 %v80
    %v120 = vpack.c.b16 %v105, %v104
    %v121 = vpack.c.b16 %v107, %v106
    %v122 = vpack.c.b16 %v109, %v108
    %v123 = vpack.c.b16 %v111, %v110
    %v124 = vpack.c.b16 %v113, %v112
    %v125 = vpack.c.b16 %v115, %v114
    %v126 = vpack.c.b16 %v117, %v116
    %v127 = vpack.c.b16 %v119, %v118
    %136 = vmatprep.subr.bf16.mxu0 0
    %137 = vmatpush1.bf16.msra.mxu0 %v120
    %138 = vmatprep.subr.bf16.mxu0 0
    %139 = vmatpush1.bf16.msra.mxu0 %v121
    %140 = vmatprep.subr.bf16.mxu0 0
    %141 = vmatpush1.bf16.msra.mxu0 %v122
    %142 = vmatprep.subr.bf16.mxu0 0
    %143 = vmatpush1.bf16.msra.mxu0 %v123
    %144 = vmatprep.subr.bf16.mxu0 0
    %145 = vmatpush1.bf16.msra.mxu0 %v124
    %146 = vmatprep.subr.bf16.mxu0 0
    %147 = vmatpush1.bf16.msra.mxu0 %v125
    %148 = vmatprep.subr.bf16.mxu0 0
    %149 = vmatpush1.bf16.msra.mxu0 %v126
    %150 = vmatprep.subr.bf16.mxu0 0
    %151 = vmatpush1.bf16.msra.mxu0 %v127
    %152 = vmatprep.subr.bf16.mxu0 0
    %153 = vmatpush1.bf16.msra.mxu0 0
    %154 = vmatprep.subr.bf16.mxu0 0
    %155 = vmatpush1.bf16.msra.mxu0 0
    %156 = vmatprep.subr.bf16.mxu0 0
    %157 = vmatpush1.bf16.msra.mxu0 0
    %158 = vmatprep.subr.bf16.mxu0 0
    %159 = vmatpush1.bf16.msra.mxu0 0
    %160 = vmatprep.subr.bf16.mxu0 0
    %161 = vmatpush1.bf16.msra.mxu0 0
    %162 = vmatprep.subr.bf16.mxu0 0
    %163 = vmatpush1.bf16.msra.mxu0 0
    %164 = vmatprep.subr.bf16.mxu0 0
    %165 = vmatpush1.bf16.msra.mxu0 0
    %166 = vmatprep.subr.bf16.mxu0 0
    %167 = vmatpush1.bf16.msra.mxu0 0
    %168 = vmatprep.mubr.bf16.mxu0 0
    %169 = vmatmul.mubr.bf16.gmra.mrb[0].mxu0 %v64
    %v170 = vpop.f32.mrb[0].mxu0
    %v171 = vadd.f32 %v86, %v170
    %v172 = vpop.f32.mrb[0].mxu0
    %v173 = vpop.f32.mrb[0].mxu0
    %v174 = vpop.f32.mrb[0].mxu0
    %175 = vdwg.mxu0
    %v176 = vtanh.pop %v171
    %v177 = vpack.c.bf16 %v176, %v176
    %v178 = vld [vmem:[#allocation7] sm:$0xf]
    %v179 = vld [vmem:[#allocation7 + $0x4] sm:$0xf]
    %v180 = vld [vmem:[#allocation7 + $0x8] sm:$0xf]
    %v181 = vld [vmem:[#allocation7 + $0xc] sm:$0xf]
    %v182 = vld [vmem:[#allocation7 + $0x10] sm:$0xf]
    %v183 = vld [vmem:[#allocation7 + $0x14] sm:$0xf]
    %v184 = vld [vmem:[#allocation7 + $0x18] sm:$0xf]
    %v185 = vld [vmem:[#allocation7 + $0x1c] sm:$0xf]
    %v186 = vld [vmem:[#allocation7 + $0x20] sm:$0xf]
    %v187 = vld [vmem:[#allocation7 + $0x24] sm:$0xf]
    %v188 = vld [vmem:[#allocation7 + $0x28] sm:$0xf]
    %v189 = vld [vmem:[#allocation7 + $0x2c] sm:$0xf]
    %v190 = vld [vmem:[#allocation7 + $0x30] sm:$0xf]
    %v191 = vld [vmem:[#allocation7 + $0x34] sm:$0xf]
    %v192 = vld [vmem:[#allocation7 + $0x38] sm:$0xf]
    %v193 = vld [vmem:[#allocation7 + $0x3c] sm:$0xf]
    %v194 = vld [vmem:[%s4] sm:$0x1]
    %v196 = vlaneseq
    %v197 = vshrl.u32 %v196, 7
    %v198 = vsub.s32 0, %v197
    %v199 = vrot.slane %v194, %v198
    %v217 = vunpack.c.l.b16 %v178
    %v218 = vunpack.c.l.b16 %v179
    %v219 = vunpack.c.l.b16 %v180
    %v220 = vunpack.c.l.b16 %v181
    %v221 = vunpack.c.l.b16 %v182
    %v222 = vunpack.c.l.b16 %v183
    %v223 = vunpack.c.l.b16 %v184
    %v224 = vunpack.c.l.b16 %v185
    %v225 = vunpack.c.l.b16 %v186
    %v226 = vunpack.c.l.b16 %v187
    %v227 = vunpack.c.l.b16 %v188
    %v228 = vunpack.c.l.b16 %v189
    %v229 = vunpack.c.l.b16 %v190
    %v230 = vunpack.c.l.b16 %v191
    %v231 = vunpack.c.l.b16 %v192
    %v232 = vunpack.c.l.b16 %v193
    %v233 = vpack.c.b16 %v218, %v217
    %v234 = vpack.c.b16 %v220, %v219
    %v235 = vpack.c.b16 %v222, %v221
    %v236 = vpack.c.b16 %v224, %v223
    %v237 = vpack.c.b16 %v226, %v225
    %v238 = vpack.c.b16 %v228, %v227
    %v239 = vpack.c.b16 %v230, %v229
    %v240 = vpack.c.b16 %v232, %v231
    %249 = vmatprep.subr.bf16.mxu0 0
    %250 = vmatpush1.bf16.msra.mxu0 %v233
    %251 = vmatprep.subr.bf16.mxu0 0
    %252 = vmatpush1.bf16.msra.mxu0 %v234
    %253 = vmatprep.subr.bf16.mxu0 0
    %254 = vmatpush1.bf16.msra.mxu0 %v235
    %255 = vmatprep.subr.bf16.mxu0 0
    %256 = vmatpush1.bf16.msra.mxu0 %v236
    %257 = vmatprep.subr.bf16.mxu0 0
    %258 = vmatpush1.bf16.msra.mxu0 %v237
    %259 = vmatprep.subr.bf16.mxu0 0
    %260 = vmatpush1.bf16.msra.mxu0 %v238
    %261 = vmatprep.subr.bf16.mxu0 0
    %262 = vmatpush1.bf16.msra.mxu0 %v239
    %263 = vmatprep.subr.bf16.mxu0 0
    %264 = vmatpush1.bf16.msra.mxu0 %v240
    %265 = vmatprep.subr.bf16.mxu0 0
    %266 = vmatpush1.bf16.msra.mxu0 0
    %267 = vmatprep.subr.bf16.mxu0 0
    %268 = vmatpush1.bf16.msra.mxu0 0
    %269 = vmatprep.subr.bf16.mxu0 0
    %270 = vmatpush1.bf16.msra.mxu0 0
    %271 = vmatprep.subr.bf16.mxu0 0
    %272 = vmatpush1.bf16.msra.mxu0 0
    %273 = vmatprep.subr.bf16.mxu0 0
    %274 = vmatpush1.bf16.msra.mxu0 0
    %275 = vmatprep.subr.bf16.mxu0 0
    %276 = vmatpush1.bf16.msra.mxu0 0
    %277 = vmatprep.subr.bf16.mxu0 0
    %278 = vmatpush1.bf16.msra.mxu0 0
    %279 = vmatprep.subr.bf16.mxu0 0
    %280 = vmatpush1.bf16.msra.mxu0 0
    %281 = vmatprep.mubr.bf16.mxu0 0
    %282 = vmatmul.mubr.bf16.gmra.mrb[0].mxu0 %v177
    %v283 = vpop.f32.mrb[0].mxu0
    %v284 = vadd.f32 %v199, %v283
    %v285 = vpop.f32.mrb[0].mxu0
    %v286 = vpop.f32.mrb[0].mxu0
    %v287 = vpop.f32.mrb[0].mxu0
    %288 = vdwg.mxu0
    %289 = vst [vmem:[#allocation8] sm:$0xff] %v284
    // Predicated region
    $region34: #{tpu_custom_call.1} parent=1 // pred_check
      _
    $region35: #{tpu_custom_call.1} parent=1 // pred_check_branch
      %291 = sbr.rel (0) target = $region37
    $region36: #{tpu_custom_call.1} parent=1 // pred_region
      %s293 = ssub.s32 128, 32
      %294 = vsyncadd [#allocation4], %s293
      %s295 = sshll.u32 [#allocation8], 4
      %s296 = int_to_ptr.vmem [resolvable:$true] %s295
      %301 = dma.vmem_to_hbm [thread:$0]  %s296, 32, %s5, [#allocation4], 32, 32, 2
    $region37: #{tpu_custom_call.1} parent=1 // pred_fallthru
      _
    // Predicated region
    $region38: #{tpu_custom_call.1} parent=1 // pred_check
      _
    $region39: #{tpu_custom_call.1} parent=1 // pred_check_branch
      %303 = sbr.rel (0) target = $region41
    $region40: #{tpu_custom_call.1} parent=1 // pred_region
      %304 = dma.done [#allocation4], 128
    $region41: #{tpu_custom_call.1} parent=1 // pred_fallthru
      _
    %305 = vsyncpa [#allocation3], 1
    %306 = vsyncpa [#allocation6], 1
    %307 = vsyncpa [#allocation4], 1

</llo_original>
